<compile_context>
chip_gen: v7x
topology: tpu7x:2x2x1
jax: 0.10.0
libtpu: 0.0.40
codegen_flags: <defaults>
</compile_context>

<pallas_src>
import functools

import numpy as np
import jax
import jax.numpy as jnp
from jax import lax
from jax.experimental import pallas as pl
from jax.experimental.pallas import tpu as pltpu


def _shape_loss_kernel(probs_ref, loss_ref, valid_ref, *,
                       eps, fg_idx, min_pixels, hw, img_w):
    # probs_ref: (C, S, 128) — one image, channels x flattened-padded spatial.
    C, S, L = probs_ref.shape

    # Foreground channel plane (cast to f32 on load; input may be bf16 in HBM).
    fg = probs_ref[fg_idx].astype(jnp.float32)            # (S, L)

    # mask == (argmax over channels == fg_idx), first-occurrence tie-break.
    is_fg = None
    for c in range(C):
        if c == fg_idx:
            continue
        pc = probs_ref[c].astype(jnp.float32)
        cond = (fg > pc) if c < fg_idx else (fg >= pc)
        is_fg = cond if is_fg is None else jnp.logical_and(is_fg, cond)

    # Flat pixel index -> (h, w) coordinates (same order as torch.nonzero).
    flat_i = (lax.broadcasted_iota(jnp.int32, (S, L), 0) * L +
              lax.broadcasted_iota(jnp.int32, (S, L), 1))
    if S * L != hw:                                        # exclude padded tail
        is_fg = jnp.logical_and(is_fg, flat_i < hw)
    mask = is_fg.astype(jnp.float32)

    flat = flat_i.astype(jnp.float32)
    # +0.5 guards the floor against 1-ulp-low reciprocal-division results.
    hh = jnp.floor((flat + 0.5) / float(img_w))
    ww = flat - hh * float(img_w)

    # Zeroth / first moments -> centroid.
    n = jnp.sum(mask)
    n_safe = jnp.maximum(n, 1.0)
    ch = jnp.sum(mask * hh) / n_safe
    cw = jnp.sum(mask * ww) / n_safe
    dh = hh - ch
    dw = ww - cw

    # Unbiased covariance (N-1, same as torch.cov / np.cov) + eps * I.
    denom = jnp.maximum(n - 1.0, 1.0)
    c_hh = jnp.sum(mask * dh * dh) / denom + eps
    c_ww = jnp.sum(mask * dw * dw) / denom + eps
    c_hw = jnp.sum(mask * dh * dw) / denom

    # Closed-form 2x2 inverse.
    det = c_hh * c_ww - c_hw * c_hw
    det = jnp.where(jnp.abs(det) > 0.0, det, 1.0)
    inv_det = 1.0 / det
    inv_hh = c_ww * inv_det
    inv_ww = c_hh * inv_det
    inv_hw = -c_hw * inv_det

    # Mahalanobis term per foreground pixel, then mean((m - 1)^2).
    q = inv_hh * dh * dh + 2.0 * inv_hw * dh * dw + inv_ww * dw * dw
    loss_b = jnp.sum(mask * (q - 1.0) ** 2) / n_safe

    valid = n >= min_pixels                                # skip if < 10 px
    loss_val = jnp.where(valid, loss_b, 0.0)
    valid_val = jnp.where(valid, 1.0, 0.0)

    # Lane/sublane-dense per-image outputs (unmasked full-tile stores).
    loss_ref[...] = jnp.broadcast_to(loss_val, loss_ref.shape).astype(jnp.float32)
    valid_ref[...] = jnp.broadcast_to(valid_val, valid_ref.shape).astype(jnp.float32)


def elliptical_shape_loss(segmentation_probs, epsilon=1e-6,
                          foreground_class_idx=1):
    """JAX/Pallas equivalent of EllipticalShapeLoss.forward(probs, None)."""
    B, C, H, W = segmentation_probs.shape
    if C <= 1 or C <= foreground_class_idx:
        return jnp.float32(0.0)

    HW = H * W
    LANES = 128
    S = max(1, pl.cdiv(HW, LANES))
    HWp = S * LANES

    # Lane-dense flattening; keep native dtype (no f32 up-cast in the wrapper).
    x = segmentation_probs.reshape(B, C, HW)
    if HWp != HW:
        x = jnp.pad(x, ((0, 0), (0, 0), (0, HWp - HW)))
    x = x.reshape(B, C, S, LANES)

    kernel = functools.partial(
        _shape_loss_kernel,
        eps=float(epsilon),
        fg_idx=int(foreground_class_idx),
        min_pixels=10.0,
        hw=HW,
        img_w=W,
    )

    loss_rows, valid_rows = pl.pallas_call(
        kernel,
        out_shape=(jax.ShapeDtypeStruct((B, 8, 128), jnp.float32),
                   jax.ShapeDtypeStruct((B, 8, 128), jnp.float32)),
        grid_spec=pltpu.PrefetchScalarGridSpec(
            num_scalar_prefetch=0,
            grid=(B,),
            in_specs=[pl.BlockSpec((None, C, S, LANES),
                                   lambda b: (b, 0, 0, 0))],
            out_specs=[pl.BlockSpec((1, 8, 128), lambda b: (b, 0, 0)),
                       pl.BlockSpec((1, 8, 128), lambda b: (b, 0, 0))],
        ),
        compiler_params=pltpu.CompilerParams(
            dimension_semantics=("parallel",)),
    )(x)

    total = jnp.sum(loss_rows[:, 0, 0])
    cnt = jnp.sum(valid_rows[:, 0, 0])
    return jnp.where(cnt > 0.0, total / jnp.maximum(cnt, 1.0), jnp.float32(0.0))


def _reference_loss(probs, eps=1e-6, fg_idx=1):
    """Pure NumPy reference mirroring the PyTorch coordinate-list formulation."""
    probs = np.asarray(probs, dtype=np.float32)
    B, C, H, W = probs.shape
    if C <= 1 or C <= fg_idx:
        return 0.0
    labels = np.argmax(probs, axis=1)
    total, count = 0.0, 0
    for b in range(B):
        mask = labels[b] == fg_idx
        if mask.sum() < 10:
            continue
        coords = np.argwhere(mask).astype(np.float32)
        if coords.shape[0] < 2:
            continue
        centroid = coords.mean(axis=0)
        cc = coords - centroid
        cov = np.cov(cc.T)                       # ddof=1, same as torch.cov
        inv = np.linalg.inv(cov + eps * np.eye(2))
        m = np.einsum('ni,ij,nj->n', cc, inv, cc)
        total += float(np.mean((m - 1.0) ** 2))
        count += 1
    return total / count if count > 0 else 0.0


if __name__ == "__main__":
    key = jax.random.PRNGKey(0)
    B, C, H, W = 2, 4, 16, 16
    logits = jax.random.normal(key, (B, C, H, W), dtype=jnp.float32)
    segmentation_probs = jax.nn.softmax(logits, axis=1)   # (B, C, H, W), NCHW

    loss = elliptical_shape_loss(segmentation_probs)
    loss = jax.block_until_ready(loss)

    ref = _reference_loss(np.asarray(segmentation_probs))
    assert np.allclose(float(loss), ref, rtol=1e-3, atol=1e-4), (float(loss), ref)

    print("KERNEL_OK")
</pallas_src>

<mosaic_0001>
module attributes {stable_mosaic.version = 11 : i64} {
  func.func @_shape_loss_kernel(%arg0: i32, %arg1: memref<1x4x2x128xf32, #tpu.memory_space<vmem>>, %arg2: memref<1x8x128xf32, #tpu.memory_space<vmem>>, %arg3: memref<1x8x128xf32, #tpu.memory_space<vmem>>) attributes {dimension_semantics = [#tpu.dimension_semantics<parallel>], iteration_bounds = array<i64: 2>, scalar_prefetch = 0 : i64, scratch_operands = 0 : i64, tpu.core_type = #tpu.core_type<tc>, window_params = [{transform_indices = @transform_0, window_bounds = array<i64: 1, 4, 2, 128>}, {transform_indices = @transform_1, window_bounds = array<i64: 1, 8, 128>}, {transform_indices = @transform_2, window_bounds = array<i64: 1, 8, 128>}]} {
    %c0 = arith.constant 0 : index
    %c1 = arith.constant 1 : index
    %c0_0 = arith.constant 0 : index
    %c0_1 = arith.constant 0 : index
    %0 = vector.load %arg1[%c0, %c1, %c0_0, %c0_1] : memref<1x4x2x128xf32, #tpu.memory_space<vmem>>, vector<1x1x2x128xf32>
    %1 = vector.shape_cast %0 : vector<1x1x2x128xf32> to vector<2x128xf32>
    %c0_2 = arith.constant 0 : index
    %c0_3 = arith.constant 0 : index
    %c0_4 = arith.constant 0 : index
    %c0_5 = arith.constant 0 : index
    %2 = vector.load %arg1[%c0_2, %c0_3, %c0_4, %c0_5] : memref<1x4x2x128xf32, #tpu.memory_space<vmem>>, vector<1x1x2x128xf32>
    %3 = vector.shape_cast %2 : vector<1x1x2x128xf32> to vector<2x128xf32>
    %4 = arith.cmpf ogt, %1, %3 : vector<2x128xf32>
    %c0_6 = arith.constant 0 : index
    %c2 = arith.constant 2 : index
    %c0_7 = arith.constant 0 : index
    %c0_8 = arith.constant 0 : index
    %5 = vector.load %arg1[%c0_6, %c2, %c0_7, %c0_8] : memref<1x4x2x128xf32, #tpu.memory_space<vmem>>, vector<1x1x2x128xf32>
    %6 = vector.shape_cast %5 : vector<1x1x2x128xf32> to vector<2x128xf32>
    %7 = arith.cmpf oge, %1, %6 : vector<2x128xf32>
    %8 = arith.andi %4, %7 : vector<2x128xi1>
    %c0_9 = arith.constant 0 : index
    %c3 = arith.constant 3 : index
    %c0_10 = arith.constant 0 : index
    %c0_11 = arith.constant 0 : index
    %9 = vector.load %arg1[%c0_9, %c3, %c0_10, %c0_11] : memref<1x4x2x128xf32, #tpu.memory_space<vmem>>, vector<1x1x2x128xf32>
    %10 = vector.shape_cast %9 : vector<1x1x2x128xf32> to vector<2x128xf32>
    %11 = arith.cmpf oge, %1, %10 : vector<2x128xf32>
    %12 = arith.andi %8, %11 : vector<2x128xi1>
    %13 = tpu.iota {dimensions = array<i32: 0>} : vector<2x128xi32>
    %c128_i32 = arith.constant 128 : i32
    %14 = vector.broadcast %c128_i32 : i32 to vector<2x128xi32>
    %15 = arith.muli %13, %14 : vector<2x128xi32>
    %16 = tpu.iota {dimensions = array<i32: 1>} : vector<2x128xi32>
    %17 = arith.addi %15, %16 : vector<2x128xi32>
    %18 = arith.extui %12 : vector<2x128xi1> to vector<2x128xi32>
    %19 = arith.sitofp %18 : vector<2x128xi32> to vector<2x128xf32>
    %20 = arith.sitofp %17 : vector<2x128xi32> to vector<2x128xf32>
    %cst = arith.constant 5.000000e-01 : f32
    %21 = vector.broadcast %cst : f32 to vector<2x128xf32>
    %22 = arith.addf %20, %21 : vector<2x128xf32>
    %cst_12 = arith.constant 1.600000e+01 : f32
    %23 = vector.broadcast %cst_12 : f32 to vector<2x128xf32>
    %24 = arith.divf %22, %23 : vector<2x128xf32>
    %25 = math.floor %24 : vector<2x128xf32>
    %cst_13 = arith.constant 1.600000e+01 : f32
    %26 = vector.broadcast %cst_13 : f32 to vector<2x128xf32>
    %27 = arith.mulf %25, %26 : vector<2x128xf32>
    %28 = arith.subf %20, %27 : vector<2x128xf32>
    %29 = vector.shape_cast %19 : vector<2x128xf32> to vector<1x2x128xf32>
    %cst_14 = arith.constant dense<0.000000e+00> : vector<1xf32>
    %30 = vector.multi_reduction <add>, %29, %cst_14 [1, 2] : vector<1x2x128xf32> to vector<1xf32>
    %31 = vector.shape_cast %30 : vector<1xf32> to vector<1x1x1xf32>
    %32 = vector.extract %31[0, 0, 0] : f32 from vector<1x1x1xf32>
    %cst_15 = arith.constant 1.000000e+00 : f32
    %33 = arith.maximumf %32, %cst_15 : f32
    %34 = arith.mulf %19, %25 : vector<2x128xf32>
    %35 = vector.shape_cast %34 : vector<2x128xf32> to vector<1x2x128xf32>
    %cst_16 = arith.constant dense<0.000000e+00> : vector<1xf32>
    %36 = vector.multi_reduction <add>, %35, %cst_16 [1, 2] : vector<1x2x128xf32> to vector<1xf32>
    %37 = vector.shape_cast %36 : vector<1xf32> to vector<1x1x1xf32>
    %38 = vector.extract %37[0, 0, 0] : f32 from vector<1x1x1xf32>
    %39 = arith.divf %38, %33 : f32
    %40 = arith.mulf %19, %28 : vector<2x128xf32>
    %41 = vector.shape_cast %40 : vector<2x128xf32> to vector<1x2x128xf32>
    %cst_17 = arith.constant dense<0.000000e+00> : vector<1xf32>
    %42 = vector.multi_reduction <add>, %41, %cst_17 [1, 2] : vector<1x2x128xf32> to vector<1xf32>
    %43 = vector.shape_cast %42 : vector<1xf32> to vector<1x1x1xf32>
    %44 = vector.extract %43[0, 0, 0] : f32 from vector<1x1x1xf32>
    %45 = arith.divf %44, %33 : f32
    %46 = vector.broadcast %39 : f32 to vector<2x128xf32>
    %47 = arith.subf %25, %46 : vector<2x128xf32>
    %48 = vector.broadcast %45 : f32 to vector<2x128xf32>
    %49 = arith.subf %28, %48 : vector<2x128xf32>
    %cst_18 = arith.constant 1.000000e+00 : f32
    %50 = arith.subf %32, %cst_18 : f32
    %cst_19 = arith.constant 1.000000e+00 : f32
    %51 = arith.maximumf %50, %cst_19 : f32
    %52 = arith.mulf %19, %47 : vector<2x128xf32>
    %53 = arith.mulf %52, %47 : vector<2x128xf32>
    %54 = vector.shape_cast %53 : vector<2x128xf32> to vector<1x2x128xf32>
    %cst_20 = arith.constant dense<0.000000e+00> : vector<1xf32>
    %55 = vector.multi_reduction <add>, %54, %cst_20 [1, 2] : vector<1x2x128xf32> to vector<1xf32>
    %56 = vector.shape_cast %55 : vector<1xf32> to vector<1x1x1xf32>
    %57 = vector.extract %56[0, 0, 0] : f32 from vector<1x1x1xf32>
    %58 = arith.divf %57, %51 : f32
    %cst_21 = arith.constant 9.99999997E-7 : f32
    %59 = arith.addf %58, %cst_21 : f32
    %60 = arith.mulf %19, %49 : vector<2x128xf32>
    %61 = arith.mulf %60, %49 : vector<2x128xf32>
    %62 = vector.shape_cast %61 : vector<2x128xf32> to vector<1x2x128xf32>
    %cst_22 = arith.constant dense<0.000000e+00> : vector<1xf32>
    %63 = vector.multi_reduction <add>, %62, %cst_22 [1, 2] : vector<1x2x128xf32> to vector<1xf32>
    %64 = vector.shape_cast %63 : vector<1xf32> to vector<1x1x1xf32>
    %65 = vector.extract %64[0, 0, 0] : f32 from vector<1x1x1xf32>
    %66 = arith.divf %65, %51 : f32
    %cst_23 = arith.constant 9.99999997E-7 : f32
    %67 = arith.addf %66, %cst_23 : f32
    %68 = arith.mulf %19, %47 : vector<2x128xf32>
    %69 = arith.mulf %68, %49 : vector<2x128xf32>
    %70 = vector.shape_cast %69 : vector<2x128xf32> to vector<1x2x128xf32>
    %cst_24 = arith.constant dense<0.000000e+00> : vector<1xf32>
    %71 = vector.multi_reduction <add>, %70, %cst_24 [1, 2] : vector<1x2x128xf32> to vector<1xf32>
    %72 = vector.shape_cast %71 : vector<1xf32> to vector<1x1x1xf32>
    %73 = vector.extract %72[0, 0, 0] : f32 from vector<1x1x1xf32>
    %74 = arith.divf %73, %51 : f32
    %75 = arith.mulf %59, %67 : f32
    %76 = arith.mulf %74, %74 : f32
    %77 = arith.subf %75, %76 : f32
    %78 = math.absf %77 : f32
    %cst_25 = arith.constant 0.000000e+00 : f32
    %79 = arith.cmpf ogt, %78, %cst_25 : f32
    %cst_26 = arith.constant 1.000000e+00 : f32
    %80 = arith.select %79, %77, %cst_26 : f32
    %cst_27 = arith.constant 1.000000e+00 : f32
    %81 = arith.divf %cst_27, %80 : f32
    %82 = arith.mulf %67, %81 : f32
    %83 = arith.mulf %59, %81 : f32
    %cst_28 = arith.constant 0.000000e+00 : f32
    %84 = arith.subf %cst_28, %74 : f32
    %85 = arith.mulf %84, %81 : f32
    %86 = vector.broadcast %82 : f32 to vector<2x128xf32>
    %87 = arith.mulf %86, %47 : vector<2x128xf32>
    %88 = arith.mulf %87, %47 : vector<2x128xf32>
    %cst_29 = arith.constant 2.000000e+00 : f32
    %89 = arith.mulf %cst_29, %85 : f32
    %90 = vector.broadcast %89 : f32 to vector<2x128xf32>
    %91 = arith.mulf %90, %47 : vector<2x128xf32>
    %92 = arith.mulf %91, %49 : vector<2x128xf32>
    %93 = arith.addf %88, %92 : vector<2x128xf32>
    %94 = vector.broadcast %83 : f32 to vector<2x128xf32>
    %95 = arith.mulf %94, %49 : vector<2x128xf32>
    %96 = arith.mulf %95, %49 : vector<2x128xf32>
    %97 = arith.addf %93, %96 : vector<2x128xf32>
    %cst_30 = arith.constant 1.000000e+00 : f32
    %98 = vector.broadcast %cst_30 : f32 to vector<2x128xf32>
    %99 = arith.subf %97, %98 : vector<2x128xf32>
    %100 = arith.mulf %99, %99 : vector<2x128xf32>
    %101 = arith.mulf %19, %100 : vector<2x128xf32>
    %102 = vector.shape_cast %101 : vector<2x128xf32> to vector<1x2x128xf32>
    %cst_31 = arith.constant dense<0.000000e+00> : vector<1xf32>
    %103 = vector.multi_reduction <add>, %102, %cst_31 [1, 2] : vector<1x2x128xf32> to vector<1xf32>
    %104 = vector.shape_cast %103 : vector<1xf32> to vector<1x1x1xf32>
    %105 = vector.extract %104[0, 0, 0] : f32 from vector<1x1x1xf32>
    %106 = arith.divf %105, %33 : f32
    %cst_32 = arith.constant 1.000000e+01 : f32
    %107 = arith.cmpf oge, %32, %cst_32 : f32
    %cst_33 = arith.constant 0.000000e+00 : f32
    %108 = arith.select %107, %106, %cst_33 : f32
    %cst_34 = arith.constant 1.000000e+00 : f32
    %cst_35 = arith.constant 0.000000e+00 : f32
    %109 = arith.select %107, %cst_34, %cst_35 : f32
    %110 = vector.broadcast %108 : f32 to vector<1x8x128xf32>
    %c0_36 = arith.constant 0 : index
    %c0_37 = arith.constant 0 : index
    %c0_38 = arith.constant 0 : index
    %111 = vector.load %arg2[%c0_36, %c0_37, %c0_38] : memref<1x8x128xf32, #tpu.memory_space<vmem>>, vector<1x8x128xf32>
    tpu.vector_store %arg2[%c0_36, %c0_37, %c0_38], %110 {strides = array<i32>} : memref<1x8x128xf32, #tpu.memory_space<vmem>>, vector<1x8x128xf32>,
    %112 = vector.broadcast %109 : f32 to vector<1x8x128xf32>
    %c0_39 = arith.constant 0 : index
    %c0_40 = arith.constant 0 : index
    %c0_41 = arith.constant 0 : index
    %113 = vector.load %arg3[%c0_39, %c0_40, %c0_41] : memref<1x8x128xf32, #tpu.memory_space<vmem>>, vector<1x8x128xf32>
    tpu.vector_store %arg3[%c0_39, %c0_40, %c0_41], %112 {strides = array<i32>} : memref<1x8x128xf32, #tpu.memory_space<vmem>>, vector<1x8x128xf32>,
    return
  }
  func.func @transform_0(%arg0: i32) -> (i32, i32, i32, i32) {
    %c0_i32 = arith.constant 0 : i32
    %c0_i32_0 = arith.constant 0 : i32
    %c0_i32_1 = arith.constant 0 : i32
    %c0_i32_2 = arith.constant 0 : i32
    return %arg0, %c0_i32, %c0_i32_0, %c0_i32_1 : i32, i32, i32, i32
  }
  func.func @transform_1(%arg0: i32) -> (i32, i32, i32) {
    %c0_i32 = arith.constant 0 : i32
    %c0_i32_0 = arith.constant 0 : i32
    %c0_i32_1 = arith.constant 0 : i32
    return %arg0, %c0_i32, %c0_i32_0 : i32, i32, i32
  }
  func.func @transform_2(%arg0: i32) -> (i32, i32, i32) {
    %c0_i32 = arith.constant 0 : i32
    %c0_i32_0 = arith.constant 0 : i32
    %c0_i32_1 = arith.constant 0 : i32
    return %arg0, %c0_i32, %c0_i32_0 : i32, i32, i32
  }
}

</mosaic_0001>

<llo_original>
// kernel: tpu_custom_call.1
$region0: #{tpu_custom_call.1}
  #allocation0 [shape = 'u32[]', space=smem, size = 0x4, offset = 0x4, fixed_abs, tag = 'smem constant byte address 0x4 - core index']
  #allocation1 [shape = 'u32[144,128]{1,0:T(1,128)}', space=vmem, size = 0x12000, scoped, tag = 'internal scratch']
  %s0 = inlined_call_operand.hbm [shape: f32[2,4,2,128], index: 0, kind: input, shape index: {}]
  %s1 = inlined_call_operand.hbm [shape: f32[2,8,128], index: 1, kind: output, shape index: {0}]
  %s2 = inlined_call_operand.hbm [shape: f32[2,8,128], index: 2, kind: output, shape index: {1}]
  %3 = xla_tuple %s1, %s2
  %s4 = sld [smem:[#allocation0]]
  $region49: #{tpu_custom_call.1} parent=0
    _
  %s6 = ssub.s32 1, %s4
  %s7 = scalar_select 0, %s6, %s4
  $region1: #{tpu_custom_call.1} parent=0
    #allocation2 [shape = 'u8[8192]{0}', space=vmem, size = 0x2000, scoped, tag = 'input window, operand 0']
    #allocation3 [shape = 's32[2]{0}', space=sflag, size = 0x8, scoped, tag = 'scoped memory for tpu_custom_call.1']
    #allocation4 [shape = 's32[2]{0}', space=sflag, size = 0x8, scoped, tag = 'scoped memory for tpu_custom_call.1']
    #allocation5 [shape = 'u8[8192]{0}', space=vmem, size = 0x2000, scoped, tag = 'output window, operand 0']
    #allocation6 [shape = 'u8[8192]{0}', space=vmem, size = 0x2000, scoped, tag = 'output window, operand 1']
    #allocation7 [shape = 's32[2]{0}', space=sflag, size = 0x8, scoped, tag = 'scoped memory for tpu_custom_call.1']
    %8 = vsyncpa [#allocation3], 0
    %s9 = scalar_lea.sflag [#allocation3], 1
    %10 = vsyncpa %s9, 0
    %11 = vsyncpa [#allocation4], 0
    %s12 = scalar_lea.sflag [#allocation4], 1
    %13 = vsyncpa %s12, 0
    %14 = vsyncpa [#allocation7], 0
    %s15 = scalar_lea.sflag [#allocation7], 1
    %16 = vsyncpa %s15, 0
    loop: start=0, step=1, limit=4
    $region2: #{tpu_custom_call.1} parent=1 // loop_pre_header
      _
    $region3: #{tpu_custom_call.1} parent=1 // loop_header
      %s18 = sphi 0, %s22
      %p19 = scmp.ge.s32.totalorder %s18, 4
      %s28 = sphi 0, %s30
      %s31 = sphi 0, %s28
      %s32 = sphi 0, %s31
      %s48 = sphi 0, %s32
      %s54 = sphi 0, %s56
      %s57 = sphi 0, %s54
      %s58 = sphi 0, %s57
      %s74 = sphi 0, %s58
      %s80 = sphi 0, %s82
      %s83 = sphi 0, %s80
      %s84 = sphi 0, %s83
      %s100 = sphi 0, %s84
    $region4: #{tpu_custom_call.1} parent=1 // loop_header_branch
      %21 = sbr.rel (%p19) target = $region8
    $region5: #{tpu_custom_call.1} parent=1 // loop_body
      %s23 = ssub.s32 %s18, 1
      %s24 = ssub.s32 %s18, 2
      %s25 = sadd.s32 %s18, 1
      %s26 = ssub.s32 %s18, %s25
      %p27 = scmp.eq.s32.totalorder %s26, 0
      %s29 = sadd.s32 %s28, 1
      %s30 = scalar_select %p27, %s28, %s29
      %p33 = pneg %p27
      %p34 = scmp.eq.s32.totalorder %s18, 1
      %p35 = por %p33, %p34
      %p36 = scmp.ne.s32.totalorder %s28, %s31
      %p37 = scmp.eq.s32.totalorder %s18, 0
      %p38 = por %p36, %p37
      %p39 = scmp.ne.s32.totalorder %s28, %s31
      %p40 = scmp.eq.s32.totalorder %s23, 1
      %p41 = por %p39, %p40
      %p42 = scmp.ne.s32.totalorder %s31, %s32
      %p43 = scmp.eq.s32.totalorder %s23, 0
      %p44 = por %p42, %p43
      %p45 = scmp.ne.s32.totalorder %s31, %s32
      %p46 = scmp.eq.s32.totalorder %s24, 1
      %p47 = por %p45, %p46
      %p49 = scmp.ne.s32.totalorder %s32, %s48
      %p50 = scmp.eq.s32.totalorder %s24, 0
      %p51 = por %p49, %p50
      %s52 = ssub.s32 %s18, %s25
      %p53 = scmp.eq.s32.totalorder %s52, 0
      %s55 = sadd.s32 %s54, 1
      %s56 = scalar_select %p53, %s54, %s55
      %p59 = pneg %p53
      %p60 = scmp.eq.s32.totalorder %s18, 1
      %p61 = por %p59, %p60
      %p62 = scmp.ne.s32.totalorder %s54, %s57
      %p63 = scmp.eq.s32.totalorder %s18, 0
      %p64 = por %p62, %p63
      %p65 = scmp.ne.s32.totalorder %s54, %s57
      %p66 = scmp.eq.s32.totalorder %s23, 1
      %p67 = por %p65, %p66
      %p68 = scmp.ne.s32.totalorder %s57, %s58
      %p69 = scmp.eq.s32.totalorder %s23, 0
      %p70 = por %p68, %p69
      %p71 = scmp.ne.s32.totalorder %s57, %s58
      %p72 = scmp.eq.s32.totalorder %s24, 1
      %p73 = por %p71, %p72
      %p75 = scmp.ne.s32.totalorder %s58, %s74
      %p76 = scmp.eq.s32.totalorder %s24, 0
      %p77 = por %p75, %p76
      %s78 = ssub.s32 %s18, %s25
      %p79 = scmp.eq.s32.totalorder %s78, 0
      %s81 = sadd.s32 %s80, 1
      %s82 = scalar_select %p79, %s80, %s81
      %p85 = pneg %p79
      %p86 = scmp.eq.s32.totalorder %s18, 1
      %p87 = por %p85, %p86
      %p88 = scmp.ne.s32.totalorder %s80, %s83
      %p89 = scmp.eq.s32.totalorder %s18, 0
      %p90 = por %p88, %p89
      %p91 = scmp.ne.s32.totalorder %s80, %s83
      %p92 = scmp.eq.s32.totalorder %s23, 1
      %p93 = por %p91, %p92
      %p94 = scmp.ne.s32.totalorder %s83, %s84
      %p95 = scmp.eq.s32.totalorder %s23, 0
      %p96 = por %p94, %p95
      %p97 = scmp.ne.s32.totalorder %s83, %s84
      %p98 = scmp.eq.s32.totalorder %s24, 1
      %p99 = por %p97, %p98
      %p101 = scmp.ne.s32.totalorder %s84, %s100
      %p102 = scmp.eq.s32.totalorder %s24, 0
      %p103 = por %p101, %p102
      %p104 = scmp.le.s32.totalorder 1, %s18
      %p105 = scmp.lt.s32.totalorder %s18, 3
      %p106 = pnand %p104, %p105
      %p107 = pneg %p106
      // Predicated region
      $region9: #{tpu_custom_call.1} parent=5 // pred_check
        _
      $region10: #{tpu_custom_call.1} parent=5 // pred_check_branch
        %109 = sbr.rel (%p106) target = $region12
      $region11: #{tpu_custom_call.1} parent=5 // pred_region
        %s110 = ssub.s32 %s18, 1
      $region12: #{tpu_custom_call.1} parent=5 // pred_fallthru
        _
      %p111 = scmp.lt.s32.totalorder %s18, 2
      // Predicated region
      $region13: #{tpu_custom_call.1} parent=5 // pred_check
        %p112 = pneg %p111
      $region14: #{tpu_custom_call.1} parent=5 // pred_check_branch
        %114 = sbr.rel (%p112) target = $region16
      $region15: #{tpu_custom_call.1} parent=5 // pred_region
        // Predicated region
        $region17: #{tpu_custom_call.1} parent=15 // pred_check
          %p115 = pneg %p38
        $region18: #{tpu_custom_call.1} parent=15 // pred_check_branch
          %117 = sbr.rel (%p115) target = $region20
        $region19: #{tpu_custom_call.1} parent=15 // pred_region
          %s118 = sand.u32 %s28, 1
          %s119 = scalar_lea.sflag [#allocation3], %s118
          %s120 = sand.u32 %s28, 1
          %s121 = smul.addr %s120, 8
          %s122 = scalar_lea.vmem [#allocation2], %s121
          %s124 = ssub.s32 128, 128
          %125 = vsyncadd %s119, %s124
          %s126 = smul.addr %s18, 4
          %s127 = smul.addr %s126, 32
          %s128 = scalar_lea.hbm %s0, %s127
          %s129 = sshll.u32 %s122, 4
          %s130 = int_to_ptr.vmem [resolvable:$true] %s129
          %135 = dma.hbm_to_vmem [thread:$0]  %s128, 128, %s130, %s119, 32, 32, 2
        $region20: #{tpu_custom_call.1} parent=15 // pred_fallthru
          _
      $region16: #{tpu_custom_call.1} parent=5 // pred_fallthru
        _
      %p136 = scmp.le.s32.totalorder 1, %s18
      %p137 = scmp.lt.s32.totalorder %s18, 3
      %p138 = pnand %p136, %p137
      %p139 = pneg %p138
      // Predicated region
      $region21: #{tpu_custom_call.1} parent=5 // pred_check
        _
      $region22: #{tpu_custom_call.1} parent=5 // pred_check_branch
        %141 = sbr.rel (%p138) target = $region24
      $region23: #{tpu_custom_call.1} parent=5 // pred_region
        %s142 = ssub.s32 %s18, 1
        %s143 = sand.u32 %s31, 1
        %s144 = scalar_lea.sflag [#allocation3], %s143
        %s145 = sand.u32 %s31, 1
        %s146 = smul.addr %s145, 8
        %s147 = scalar_lea.vmem [#allocation2], %s146
        // Predicated region
        $region25: #{tpu_custom_call.1} parent=23 // pred_check
          %p148 = pneg %p44
        $region26: #{tpu_custom_call.1} parent=23 // pred_check_branch
          %150 = sbr.rel (%p148) target = $region28
        $region27: #{tpu_custom_call.1} parent=23 // pred_region
          %151 = dma.done %s144, 128
        $region28: #{tpu_custom_call.1} parent=23 // pred_fallthru
          _
        %s152 = sand.u32 %s31, 1
        %s153 = scalar_lea.sflag [#allocation3], %s152
        %s154 = sand.u32 %s31, 1
        %s155 = smul.addr %s154, 8
        %s156 = scalar_lea.vmem [#allocation2], %s155
        %p157 = pneg %p44
        %p158 = pneg %p41
        %p159 = pneg %p70
        %p160 = pneg %p67
        %s161 = sand.u32 %s57, 1
        %s162 = scalar_lea.sflag [#allocation4], %s161
        %s163 = sand.u32 %s57, 1
        %s164 = smul.addr %s163, 8
        %s165 = scalar_lea.vmem [#allocation5], %s164
        %p166 = pneg %p96
        %p167 = pneg %p93
        %s168 = sand.u32 %s83, 1
        %s169 = scalar_lea.sflag [#allocation7], %s168
        %s170 = sand.u32 %s83, 1
        %s171 = smul.addr %s170, 8
        %s172 = scalar_lea.vmem [#allocation6], %s171
        %s173 = scalar_lea.vmem %s147, 2 [#allocation2]
        %v174 = vld [vmem:[%s173] sm:$0x3]
        %v175 = vld [vmem:[%s147] sm:$0x3]
        %vm176 = vcmp.gt.f32.partialorder %v174, %v175
        %s177 = scalar_lea.vmem %s147, 4 [#allocation2]
        %v178 = vld [vmem:[%s177] sm:$0x3]
        %vm179 = vcmp.ge.f32.partialorder %v174, %v178
        %vm180 = vmand %vm176, %vm179
        %s181 = scalar_lea.vmem %s147, 6 [#allocation2]
        %v182 = vld [vmem:[%s181] sm:$0x3]
        %vm183 = vcmp.ge.f32.partialorder %v174, %v182
        %vm184 = vmand %vm180, %vm183
        %v185 = vlaneseq
        %v186 = vshrl.u32 %v185, 7
        %v187 = vmul.u32 %v186, 128
        %v188 = vlaneseq
        %v189 = vand.u32 %v188, 127
        %v190 = vadd.s32 %v187, %v189
        %v191 = vsel %vm184, 1, 0
        %v192 = vcvt.s32.f32 %v191
        %v193 = vcvt.s32.f32 %v190
        %v194 = vadd.f32 %v193, 0.5
        %v195 = vrcp.pop 16.0
        %v196 = vmul.f32 %v194, %v195
        %v197 = vfloor.f32 %v196
        %v198 = vmul.f32 %v197, 16.0
        %v199 = vsub.f32 %v193, %v198
        %vm200 = vcmask 1041408
        %v201 = vsel %vm200, %v192, 0.0
        %202 = vadd.xlane.f32.xlu0 %v201
        %v203 = vpop.xlane.xlu0 %202
        %v204 = vrot.slane %v203, 4
        %v205 = vadd.f32 %v203, %v204
        %v206 = vrot.slane %v205, 2
        %v207 = vadd.f32 %v205, %v206
        %v208 = vrot.slane %v207, 1
        %v209 = vadd.f32 %v207, %v208
        %s210 = vtos %v209
        %s211 = smax.f32 %s210, 1.0
        %v212 = vmul.f32 %v192, %v197
        %v213 = vsel %vm200, %v212, 0.0
        %214 = vadd.xlane.f32.xlu0 %v213
        %v215 = vpop.xlane.xlu0 %214
        %v216 = vrot.slane %v215, 4
        %v217 = vadd.f32 %v215, %v216
        %v218 = vrot.slane %v217, 2
        %v219 = vadd.f32 %v217, %v218
        %v220 = vrot.slane %v219, 1
        %v221 = vadd.f32 %v219, %v220
        %s222 = vtos %v221
        %v223 = vstv %s211
        %v224 = vrcp.pop %v223
        %s225 = vtos %v224
        %s226 = smul.f32 %s222, %s225
        %v227 = vmul.f32 %v192, %v199
        %v228 = vsel %vm200, %v227, 0.0
        %229 = vadd.xlane.f32.xlu0 %v228
        %v230 = vpop.xlane.xlu0 %229
        %v231 = vrot.slane %v230, 4
        %v232 = vadd.f32 %v230, %v231
        %v233 = vrot.slane %v232, 2
        %v234 = vadd.f32 %v232, %v233
        %v235 = vrot.slane %v234, 1
        %v236 = vadd.f32 %v234, %v235
        %s237 = vtos %v236
        %v238 = vstv %s211
        %v239 = vrcp.pop %v238
        %s240 = vtos %v239
        %s241 = smul.f32 %s237, %s240
        %v242 = vstv %s226
        %v243 = vsub.f32 %v197, %v242
        %v244 = vstv %s241
        %v245 = vsub.f32 %v199, %v244
        %s246 = ssub.f32 %s210, 1.0
        %s247 = smax.f32 %s246, 1.0
        %v248 = vmul.f32 %v192, %v243
        %v249 = vmul.f32 %v248, %v243
        %v250 = vsel %vm200, %v249, 0.0
        %251 = vadd.xlane.f32.xlu0 %v250
        %v252 = vpop.xlane.xlu0 %251
        %v253 = vrot.slane %v252, 4
        %v254 = vadd.f32 %v252, %v253
        %v255 = vrot.slane %v254, 2
        %v256 = vadd.f32 %v254, %v255
        %v257 = vrot.slane %v256, 1
        %v258 = vadd.f32 %v256, %v257
        %s259 = vtos %v258
        %v260 = vstv %s247
        %v261 = vrcp.pop %v260
        %s262 = vtos %v261
        %s263 = smul.f32 %s259, %s262
        %s264 = sadd.f32 %s263, 1e-06
        %v265 = vmul.f32 %v192, %v245
        %v266 = vmul.f32 %v265, %v245
        %v267 = vsel %vm200, %v266, 0.0
        %268 = vadd.xlane.f32.xlu0 %v267
        %v269 = vpop.xlane.xlu0 %268
        %v270 = vrot.slane %v269, 4
        %v271 = vadd.f32 %v269, %v270
        %v272 = vrot.slane %v271, 2
        %v273 = vadd.f32 %v271, %v272
        %v274 = vrot.slane %v273, 1
        %v275 = vadd.f32 %v273, %v274
        %s276 = vtos %v275
        %v277 = vstv %s247
        %v278 = vrcp.pop %v277
        %s279 = vtos %v278
        %s280 = smul.f32 %s276, %s279
        %s281 = sadd.f32 %s280, 1e-06
        %v282 = vmul.f32 %v248, %v245
        %v283 = vsel %vm200, %v282, 0.0
        %284 = vadd.xlane.f32.xlu0 %v283
        %v285 = vpop.xlane.xlu0 %284
        %v286 = vrot.slane %v285, 4
        %v287 = vadd.f32 %v285, %v286
        %v288 = vrot.slane %v287, 2
        %v289 = vadd.f32 %v287, %v288
        %v290 = vrot.slane %v289, 1
        %v291 = vadd.f32 %v289, %v290
        %s292 = vtos %v291
        %v293 = vstv %s247
        %v294 = vrcp.pop %v293
        %s295 = vtos %v294
        %s296 = smul.f32 %s292, %s295
        %s297 = smul.f32 %s264, %s281
        %s298 = smul.f32 %s296, %s296
        %s299 = ssub.f32 %s297, %s298
        %s300 = sand.u32 2147483647, %s299
        %p301 = scmp.gt.f32.partialorder %s300, 0.0
        %s302 = scalar_select %p301, %s299, 1.0
        %v303 = vstv %s302
        %v304 = vrcp.pop %v303
        %s305 = vtos %v304
        %s306 = smul.f32 %s281, %s305
        %s307 = smul.f32 %s264, %s305
        %s308 = ssub.f32 0.0, %s296
        %s309 = smul.f32 %s308, %s305
        %v310 = vstv %s306
        %v311 = vmul.f32 %v310, %v243
        %v312 = vmul.f32 %v311, %v243
        %s313 = smul.f32 %s309, 2.0
        %v314 = vstv %s313
        %v315 = vmul.f32 %v314, %v243
        %v316 = vmul.f32 %v315, %v245
        %v317 = vadd.f32 %v312, %v316
        %v318 = vstv %s307
        %v319 = vmul.f32 %v318, %v245
        %v320 = vmul.f32 %v319, %v245
        %v321 = vadd.f32 %v317, %v320
        %v322 = vsub.f32 %v321, 1.0
        %v323 = vmul.f32 %v322, %v322
        %v324 = vmul.f32 %v192, %v323
        %v325 = vsel %vm200, %v324, 0.0
        %326 = vadd.xlane.f32.xlu0 %v325
        %v327 = vpop.xlane.xlu0 %326
        %v328 = vrot.slane %v327, 4
        %v329 = vadd.f32 %v327, %v328
        %v330 = vrot.slane %v329, 2
        %v331 = vadd.f32 %v329, %v330
        %v332 = vrot.slane %v331, 1
        %v333 = vadd.f32 %v331, %v332
        %s334 = vtos %v333
        %v335 = vstv %s211
        %v336 = vrcp.pop %v335
        %s337 = vtos %v336
        %s338 = smul.f32 %s334, %s337
        %p339 = scmp.ge.f32.partialorder %s210, 10.0
        %s340 = scalar_select %p339, %s338, 0.0
        %s341 = scalar_select %p339, 1.0, 0.0
        %v342 = vstv %s340
        %343 = vst [vmem:[%s165] sm:$0xff] %v342
        %v344 = vstv %s341
        %345 = vst [vmem:[%s172] sm:$0xff] %v344
        %s346 = sand.u32 %s57, 1
        %s347 = scalar_lea.sflag [#allocation4], %s346
        %s348 = sand.u32 %s57, 1
        %s349 = smul.addr %s348, 8
        %s350 = scalar_lea.vmem [#allocation5], %s349
        %s351 = sand.u32 %s83, 1
        %s352 = scalar_lea.sflag [#allocation7], %s351
        %s353 = sand.u32 %s83, 1
        %s354 = smul.addr %s353, 8
        %s355 = scalar_lea.vmem [#allocation6], %s354
        // Predicated region
        $region29: #{tpu_custom_call.1} parent=23 // pred_check
          %p356 = pneg %p67
        $region30: #{tpu_custom_call.1} parent=23 // pred_check_branch
          %358 = sbr.rel (%p356) target = $region32
        $region31: #{tpu_custom_call.1} parent=23 // pred_region
          %s360 = ssub.s32 128, 128
          %361 = vsyncadd %s347, %s360
          %s362 = smul.addr %s23, 128
          %s363 = scalar_lea.hbm %s1, %s362
          %s365 = sshll.u32 %s350, 4
          %s366 = int_to_ptr.vmem [resolvable:$true] %s365
          %368 = dma.vmem_to_hbm [thread:$0]  %s366, 128, %s363, %s347
        $region32: #{tpu_custom_call.1} parent=23 // pred_fallthru
          _
        // Predicated region
        $region33: #{tpu_custom_call.1} parent=23 // pred_check
          %p369 = pneg %p93
        $region34: #{tpu_custom_call.1} parent=23 // pred_check_branch
          %371 = sbr.rel (%p369) target = $region36
        $region35: #{tpu_custom_call.1} parent=23 // pred_region
          %s373 = ssub.s32 128, 128
          %374 = vsyncadd %s352, %s373
          %s375 = smul.addr %s23, 128
          %s376 = scalar_lea.hbm %s2, %s375
          %s378 = sshll.u32 %s355, 4
          %s379 = int_to_ptr.vmem [resolvable:$true] %s378
          %381 = dma.vmem_to_hbm [thread:$0]  %s379, 128, %s376, %s352
        $region36: #{tpu_custom_call.1} parent=23 // pred_fallthru
          _
      $region24: #{tpu_custom_call.1} parent=5 // pred_fallthru
        _
      %p382 = scmp.le.s32.totalorder 2, %s18
      // Predicated region
      $region37: #{tpu_custom_call.1} parent=5 // pred_check
        %p383 = pneg %p382
      $region38: #{tpu_custom_call.1} parent=5 // pred_check_branch
        %385 = sbr.rel (%p383) target = $region40
      $region39: #{tpu_custom_call.1} parent=5 // pred_region
        %s386 = ssub.s32 %s18, 2
        // Predicated region
        $region41: #{tpu_custom_call.1} parent=39 // pred_check
          %p387 = pneg %p73
        $region42: #{tpu_custom_call.1} parent=39 // pred_check_branch
          %389 = sbr.rel (%p387) target = $region44
        $region43: #{tpu_custom_call.1} parent=39 // pred_region
          %s390 = sand.u32 %s58, 1
          %s391 = scalar_lea.sflag [#allocation4], %s390
          %s392 = sand.u32 %s58, 1
          %s393 = smul.addr %s392, 8
          %s394 = scalar_lea.vmem [#allocation5], %s393
          %395 = dma.done %s391, 128
        $region44: #{tpu_custom_call.1} parent=39 // pred_fallthru
          _
        // Predicated region
        $region45: #{tpu_custom_call.1} parent=39 // pred_check
          %p396 = pneg %p99
        $region46: #{tpu_custom_call.1} parent=39 // pred_check_branch
          %398 = sbr.rel (%p396) target = $region48
        $region47: #{tpu_custom_call.1} parent=39 // pred_region
          %s399 = sand.u32 %s84, 1
          %s400 = scalar_lea.sflag [#allocation7], %s399
          %s401 = sand.u32 %s84, 1
          %s402 = smul.addr %s401, 8
          %s403 = scalar_lea.vmem [#allocation6], %s402
          %404 = dma.done %s400, 128
        $region48: #{tpu_custom_call.1} parent=39 // pred_fallthru
          _
      $region40: #{tpu_custom_call.1} parent=5 // pred_fallthru
        _
    $region6: #{tpu_custom_call.1} parent=1 // loop_footer
      %s22 = sadd.s32 1, %s18
    $region7: #{tpu_custom_call.1} parent=1 // loop_footer_branch
      %17 = sbr.rel target = $region3
    $region8: #{tpu_custom_call.1} parent=1 // loop_exit
      _
    %405 = vsyncpa [#allocation3], 1
    %s406 = scalar_lea.sflag [#allocation3], 1
    %407 = vsyncpa %s406, 1
    %408 = vsyncpa [#allocation4], 1
    %s409 = scalar_lea.sflag [#allocation4], 1
    %410 = vsyncpa %s409, 1
    %411 = vsyncpa [#allocation7], 1
    %s412 = scalar_lea.sflag [#allocation7], 1
    %413 = vsyncpa %s412, 1

</llo_original>
